<compile_context>
chip_gen: v7x
topology: tpu7x:2x2x1
jax: 0.10.0
libtpu: 0.0.40
codegen_flags: <defaults>
</compile_context>

<pallas_src>
import numpy as np
import jax
import jax.numpy as jnp
from jax.experimental import pallas as pl
from jax.experimental.pallas import tpu as pltpu


# ----------------------------------------------------------------------------
# Glue: bicubic (PIL-style) interpolation weight matrices + center-crop fold.
# ----------------------------------------------------------------------------
def _cubic(x, a=-0.5):
    x = np.abs(x)
    return np.where(
        x < 1.0,
        ((a + 2.0) * x - (a + 3.0)) * x * x + 1.0,
        np.where(x < 2.0, a * x ** 3 - 5.0 * a * x ** 2 + 8.0 * a * x - 4.0 * a, 0.0),
    )


def _resize_matrix(in_size, out_size):
    """PIL-style separable bicubic resize weights, shape (out_size, in_size)."""
    scale = in_size / out_size
    filterscale = max(scale, 1.0)          # antialias when downscaling
    support = 2.0 * filterscale            # bicubic support = 2
    W = np.zeros((out_size, in_size), dtype=np.float64)
    for i in range(out_size):
        center = (i + 0.5) * scale
        lo = max(int(np.floor(center - support + 0.5)), 0)
        hi = min(int(np.ceil(center + support + 0.5)), in_size)
        js = np.arange(lo, hi)
        w = _cubic((js + 0.5 - center) / filterscale)
        s = w.sum()
        if s != 0.0:
            w = w / s
        W[i, lo:hi] = w
    return W.astype(np.float32)


def build_resize_crop_matrices(h_in, w_in, image_size):
    """Resize smaller edge -> image_size (torchvision Resize([S]) on PIL), then
    fold CenterCrop(image_size) into the weight matrices."""
    if h_in <= w_in:
        new_h = image_size
        new_w = int(image_size * w_in / h_in)
    else:
        new_w = image_size
        new_h = int(image_size * h_in / w_in)
    Wh = _resize_matrix(h_in, new_h)       # (new_h, h_in)
    Ww = _resize_matrix(w_in, new_w)       # (new_w, w_in)
    top = int(round((new_h - image_size) / 2.0))
    left = int(round((new_w - image_size) / 2.0))
    A = Wh[top:top + image_size, :]                     # (S, H_in)
    Bt = Ww[left:left + image_size, :].T.copy()         # (W_in, S)
    return jnp.asarray(A), jnp.asarray(Bt)


# ----------------------------------------------------------------------------
# Pallas kernel: one batch item per grid step -> resize+crop+convert+normalize
# for all C channels of that image.
# ----------------------------------------------------------------------------
def _transform_kernel(scale_ref, bias_ref, x_ref, a_ref, bt_ref, o_ref):
    a = a_ref[...]                       # (S, H_in)  bf16, resident across steps
    bt = bt_ref[...]                     # (W_in, S)  bf16, resident across steps
    C = x_ref.shape[1]
    for c in range(C):                   # static unroll, C is small (e.g. 3)
        # uint8 -> f32 (exact) -> bf16 (exact for 0..255), done in-kernel so the
        # DMA from HBM moves only u8 bytes.
        xc = x_ref[0, c, :, :].astype(jnp.float32).astype(jnp.bfloat16)   # (H, W)
        # (x @ Bt) then A @ (.)  ==  A @ x @ Bt  (separable resize + crop).
        u = jnp.dot(xc, bt, preferred_element_type=jnp.float32)          # (H, S) f32
        y = jnp.dot(a, u.astype(jnp.bfloat16),
                    preferred_element_type=jnp.float32)                  # (S, S) f32
        # (y / 255 - mean[c]) / std[c]  ==  y * scale[c] + bias[c]   (f32 epilogue)
        o_ref[0, c, :, :] = y * scale_ref[c] + bias_ref[c]


def transform(x_u8, image_size, mean, std):
    """x_u8: uint8 array, shape (B, C, H, W) (NCHW). Returns float32 (B, C, S, S)."""
    B, C, H, W = x_u8.shape
    S = image_size
    A, Bt = build_resize_crop_matrices(H, W, S)
    A_bf = A.astype(jnp.bfloat16)
    Bt_bf = Bt.astype(jnp.bfloat16)

    mean = jnp.asarray(mean, jnp.float32)
    std = jnp.asarray(std, jnp.float32)
    scale = (1.0 / (255.0 * std)).astype(jnp.float32)       # (C,)
    bias = (-mean / std).astype(jnp.float32)                # (C,)

    flops = 2 * B * C * (H * W * S + S * H * S)
    bytes_accessed = (B * C * H * W                          # uint8 input
                      + 2 * (S * H + W * S)                  # bf16 A, Bt
                      + 4 * B * C * S * S                    # f32 output
                      + 4 * 2 * C)                           # scale/bias

    out = pl.pallas_call(
        _transform_kernel,
        out_shape=jax.ShapeDtypeStruct((B, C, S, S), jnp.float32),
        grid=(B,),
        in_specs=[
            pl.BlockSpec(memory_space=pltpu.MemorySpace.SMEM),          # scale (C,)
            pl.BlockSpec(memory_space=pltpu.MemorySpace.SMEM),          # bias  (C,)
            pl.BlockSpec((1, C, H, W), lambda b: (b, 0, 0, 0)),         # u8 image
            pl.BlockSpec((S, H), lambda b: (0, 0)),                     # A  (bf16)
            pl.BlockSpec((W, S), lambda b: (0, 0)),                     # Bt (bf16)
        ],
        out_specs=pl.BlockSpec((1, C, S, S), lambda b: (b, 0, 0, 0)),
        compiler_params=pltpu.CompilerParams(
            dimension_semantics=("parallel",),
            vmem_limit_bytes=48 * 1024 * 1024,
        ),
        cost_estimate=pl.CostEstimate(
            flops=flops, bytes_accessed=bytes_accessed, transcendentals=0),
    )(scale, bias, x_u8, A_bf, Bt_bf)
    return out


# ----------------------------------------------------------------------------
# Pure-JAX f32 reference for verification (faithful to the PyTorch module).
# ----------------------------------------------------------------------------
def transform_ref(x_u8, image_size, mean, std):
    B, C, H, W = x_u8.shape
    A, Bt = build_resize_crop_matrices(H, W, image_size)
    xf = x_u8.astype(jnp.float32)
    t = jnp.einsum("sh,bchw->bcsw", A, xf)
    y = jnp.einsum("bcsw,wt->bcst", t, Bt)
    mean = jnp.asarray(mean, jnp.float32)[None, :, None, None]
    std = jnp.asarray(std, jnp.float32)[None, :, None, None]
    return (y / 255.0 - mean) / std


if __name__ == "__main__":
    key = jax.random.PRNGKey(0)
    B, C, H, W = 2, 3, 20, 24          # small input image, smaller edge = 20
    IMAGE_SIZE = 16                    # resize smaller edge to 16, center crop 16x16
    MEAN = (0.48145466, 0.4578275, 0.40821073)
    STD = (0.26862954, 0.26130258, 0.27577711)

    x = jax.random.randint(key, (B, C, H, W), 0, 256, dtype=jnp.int32).astype(jnp.uint8)

    out = transform(x, IMAGE_SIZE, MEAN, STD)
    out = jax.block_until_ready(out)

    ref = jax.block_until_ready(transform_ref(x, IMAGE_SIZE, MEAN, STD))
    assert out.shape == (B, C, IMAGE_SIZE, IMAGE_SIZE)
    assert out.dtype == jnp.float32
    # bf16 interpolation weights / intermediate introduce ~1e-3 relative error on
    # the 0..255-scale resize, i.e. a few 1e-2 after normalization -> relaxed tol.
    np.testing.assert_allclose(np.asarray(out), np.asarray(ref), rtol=2e-2, atol=8e-2)

    print("KERNEL_OK")
</pallas_src>

<mosaic_0001>
module attributes {stable_mosaic.version = 11 : i64} {
  func.func @_transform_kernel(%arg0: i32, %arg1: memref<3xf32, #tpu.memory_space<smem>>, %arg2: memref<3xf32, #tpu.memory_space<smem>>, %arg3: memref<1x3x20x24xi8, #tpu.memory_space<vmem>>, %arg4: memref<16x20xbf16, #tpu.memory_space<vmem>>, %arg5: memref<24x16xbf16, #tpu.memory_space<vmem>>, %arg6: memref<1x3x16x16xf32, #tpu.memory_space<vmem>>) attributes {dimension_semantics = [#tpu.dimension_semantics<parallel>], iteration_bounds = array<i64: 2>, scalar_prefetch = 0 : i64, scratch_operands = 0 : i64, tpu.core_type = #tpu.core_type<tc>, window_params = [{transform_indices = @transform_0, window_bounds = array<i64: 3>}, {transform_indices = @transform_1, window_bounds = array<i64: 3>}, {transform_indices = @transform_2, window_bounds = array<i64: 1, 3, 20, 24>}, {pipeline_mode = #tpu.pipeline_mode<synchronous>, transform_indices = @transform_3, window_bounds = array<i64: 16, 20>}, {pipeline_mode = #tpu.pipeline_mode<synchronous>, transform_indices = @transform_4, window_bounds = array<i64: 24, 16>}, {transform_indices = @transform_5, window_bounds = array<i64: 1, 3, 16, 16>}]} {
    %c0 = arith.constant 0 : index
    %c0_0 = arith.constant 0 : index
    %0 = vector.load %arg4[%c0, %c0_0] : memref<16x20xbf16, #tpu.memory_space<vmem>>, vector<16x20xbf16>
    %c0_1 = arith.constant 0 : index
    %c0_2 = arith.constant 0 : index
    %1 = vector.load %arg5[%c0_1, %c0_2] : memref<24x16xbf16, #tpu.memory_space<vmem>>, vector<24x16xbf16>
    %c0_3 = arith.constant 0 : index
    %c0_4 = arith.constant 0 : index
    %c0_5 = arith.constant 0 : index
    %c0_6 = arith.constant 0 : index
    %2 = vector.load %arg3[%c0_3, %c0_4, %c0_5, %c0_6] : memref<1x3x20x24xi8, #tpu.memory_space<vmem>>, vector<1x1x20x24xi8>
    %3 = vector.shape_cast %2 : vector<1x1x20x24xi8> to vector<20x24xi8>
    %4 = arith.uitofp %3 : vector<20x24xi8> to vector<20x24xf32>
    %5 = arith.truncf %4 : vector<20x24xf32> to vector<20x24xbf16>
    %cst = arith.constant dense<0.000000e+00> : vector<20x16xf32>
    %6 = tpu.matmul %5, %1, %cst {dimension_numbers = #tpu.dot_dimension_numbers<[1], [0], [0], [1], [0, 0, 1, 1], [], []>} : vector<20x24xbf16>, vector<24x16xbf16>, vector<20x16xf32> -> vector<20x16xf32>
    %7 = arith.truncf %6 : vector<20x16xf32> to vector<20x16xbf16>
    %cst_7 = arith.constant dense<0.000000e+00> : vector<16x16xf32>
    %8 = tpu.matmul %0, %7, %cst_7 {dimension_numbers = #tpu.dot_dimension_numbers<[1], [0], [0], [1], [0, 0, 1, 1], [], []>} : vector<16x20xbf16>, vector<20x16xbf16>, vector<16x16xf32> -> vector<16x16xf32>
    %c0_8 = arith.constant 0 : index
    %9 = memref.load %arg1[%c0_8] : memref<3xf32, #tpu.memory_space<smem>>
    %10 = vector.broadcast %9 : f32 to vector<16x16xf32>
    %11 = arith.mulf %8, %10 : vector<16x16xf32>
    %c0_9 = arith.constant 0 : index
    %12 = memref.load %arg2[%c0_9] : memref<3xf32, #tpu.memory_space<smem>>
    %13 = vector.broadcast %12 : f32 to vector<16x16xf32>
    %14 = arith.addf %11, %13 : vector<16x16xf32>
    %c0_10 = arith.constant 0 : index
    %c0_11 = arith.constant 0 : index
    %c0_12 = arith.constant 0 : index
    %c0_13 = arith.constant 0 : index
    %15 = vector.load %arg6[%c0_10, %c0_11, %c0_12, %c0_13] : memref<1x3x16x16xf32, #tpu.memory_space<vmem>>, vector<1x1x16x16xf32>
    %16 = vector.shape_cast %15 : vector<1x1x16x16xf32> to vector<16x16xf32>
    %17 = vector.shape_cast %14 : vector<16x16xf32> to vector<1x1x16x16xf32>
    tpu.vector_store %arg6[%c0_10, %c0_11, %c0_12, %c0_13], %17 {strides = array<i32>} : memref<1x3x16x16xf32, #tpu.memory_space<vmem>>, vector<1x1x16x16xf32>,
    %c0_14 = arith.constant 0 : index
    %c1 = arith.constant 1 : index
    %c0_15 = arith.constant 0 : index
    %c0_16 = arith.constant 0 : index
    %18 = vector.load %arg3[%c0_14, %c1, %c0_15, %c0_16] : memref<1x3x20x24xi8, #tpu.memory_space<vmem>>, vector<1x1x20x24xi8>
    %19 = vector.shape_cast %18 : vector<1x1x20x24xi8> to vector<20x24xi8>
    %20 = arith.uitofp %19 : vector<20x24xi8> to vector<20x24xf32>
    %21 = arith.truncf %20 : vector<20x24xf32> to vector<20x24xbf16>
    %cst_17 = arith.constant dense<0.000000e+00> : vector<20x16xf32>
    %22 = tpu.matmul %21, %1, %cst_17 {dimension_numbers = #tpu.dot_dimension_numbers<[1], [0], [0], [1], [0, 0, 1, 1], [], []>} : vector<20x24xbf16>, vector<24x16xbf16>, vector<20x16xf32> -> vector<20x16xf32>
    %23 = arith.truncf %22 : vector<20x16xf32> to vector<20x16xbf16>
    %cst_18 = arith.constant dense<0.000000e+00> : vector<16x16xf32>
    %24 = tpu.matmul %0, %23, %cst_18 {dimension_numbers = #tpu.dot_dimension_numbers<[1], [0], [0], [1], [0, 0, 1, 1], [], []>} : vector<16x20xbf16>, vector<20x16xbf16>, vector<16x16xf32> -> vector<16x16xf32>
    %c1_19 = arith.constant 1 : index
    %25 = memref.load %arg1[%c1_19] : memref<3xf32, #tpu.memory_space<smem>>
    %26 = vector.broadcast %25 : f32 to vector<16x16xf32>
    %27 = arith.mulf %24, %26 : vector<16x16xf32>
    %c1_20 = arith.constant 1 : index
    %28 = memref.load %arg2[%c1_20] : memref<3xf32, #tpu.memory_space<smem>>
    %29 = vector.broadcast %28 : f32 to vector<16x16xf32>
    %30 = arith.addf %27, %29 : vector<16x16xf32>
    %c0_21 = arith.constant 0 : index
    %c1_22 = arith.constant 1 : index
    %c0_23 = arith.constant 0 : index
    %c0_24 = arith.constant 0 : index
    %31 = vector.load %arg6[%c0_21, %c1_22, %c0_23, %c0_24] : memref<1x3x16x16xf32, #tpu.memory_space<vmem>>, vector<1x1x16x16xf32>
    %32 = vector.shape_cast %31 : vector<1x1x16x16xf32> to vector<16x16xf32>
    %33 = vector.shape_cast %30 : vector<16x16xf32> to vector<1x1x16x16xf32>
    tpu.vector_store %arg6[%c0_21, %c1_22, %c0_23, %c0_24], %33 {strides = array<i32>} : memref<1x3x16x16xf32, #tpu.memory_space<vmem>>, vector<1x1x16x16xf32>,
    %c0_25 = arith.constant 0 : index
    %c2 = arith.constant 2 : index
    %c0_26 = arith.constant 0 : index
    %c0_27 = arith.constant 0 : index
    %34 = vector.load %arg3[%c0_25, %c2, %c0_26, %c0_27] : memref<1x3x20x24xi8, #tpu.memory_space<vmem>>, vector<1x1x20x24xi8>
    %35 = vector.shape_cast %34 : vector<1x1x20x24xi8> to vector<20x24xi8>
    %36 = arith.uitofp %35 : vector<20x24xi8> to vector<20x24xf32>
    %37 = arith.truncf %36 : vector<20x24xf32> to vector<20x24xbf16>
    %cst_28 = arith.constant dense<0.000000e+00> : vector<20x16xf32>
    %38 = tpu.matmul %37, %1, %cst_28 {dimension_numbers = #tpu.dot_dimension_numbers<[1], [0], [0], [1], [0, 0, 1, 1], [], []>} : vector<20x24xbf16>, vector<24x16xbf16>, vector<20x16xf32> -> vector<20x16xf32>
    %39 = arith.truncf %38 : vector<20x16xf32> to vector<20x16xbf16>
    %cst_29 = arith.constant dense<0.000000e+00> : vector<16x16xf32>
    %40 = tpu.matmul %0, %39, %cst_29 {dimension_numbers = #tpu.dot_dimension_numbers<[1], [0], [0], [1], [0, 0, 1, 1], [], []>} : vector<16x20xbf16>, vector<20x16xbf16>, vector<16x16xf32> -> vector<16x16xf32>
    %c2_30 = arith.constant 2 : index
    %41 = memref.load %arg1[%c2_30] : memref<3xf32, #tpu.memory_space<smem>>
    %42 = vector.broadcast %41 : f32 to vector<16x16xf32>
    %43 = arith.mulf %40, %42 : vector<16x16xf32>
    %c2_31 = arith.constant 2 : index
    %44 = memref.load %arg2[%c2_31] : memref<3xf32, #tpu.memory_space<smem>>
    %45 = vector.broadcast %44 : f32 to vector<16x16xf32>
    %46 = arith.addf %43, %45 : vector<16x16xf32>
    %c0_32 = arith.constant 0 : index
    %c2_33 = arith.constant 2 : index
    %c0_34 = arith.constant 0 : index
    %c0_35 = arith.constant 0 : index
    %47 = vector.load %arg6[%c0_32, %c2_33, %c0_34, %c0_35] : memref<1x3x16x16xf32, #tpu.memory_space<vmem>>, vector<1x1x16x16xf32>
    %48 = vector.shape_cast %47 : vector<1x1x16x16xf32> to vector<16x16xf32>
    %49 = vector.shape_cast %46 : vector<16x16xf32> to vector<1x1x16x16xf32>
    tpu.vector_store %arg6[%c0_32, %c2_33, %c0_34, %c0_35], %49 {strides = array<i32>} : memref<1x3x16x16xf32, #tpu.memory_space<vmem>>, vector<1x1x16x16xf32>,
    return
  }
  func.func @transform_0(%arg0: i32) -> i32 {
    %c0_i32 = arith.constant 0 : i32
    %c0_i32_0 = arith.constant 0 : i32
    return %c0_i32 : i32
  }
  func.func @transform_1(%arg0: i32) -> i32 {
    %c0_i32 = arith.constant 0 : i32
    %c0_i32_0 = arith.constant 0 : i32
    return %c0_i32 : i32
  }
  func.func @transform_2(%arg0: i32) -> (i32, i32, i32, i32) {
    %c0_i32 = arith.constant 0 : i32
    %c0_i32_0 = arith.constant 0 : i32
    %c0_i32_1 = arith.constant 0 : i32
    %c0_i32_2 = arith.constant 0 : i32
    return %arg0, %c0_i32, %c0_i32_0, %c0_i32_1 : i32, i32, i32, i32
  }
  func.func @transform_3(%arg0: i32) -> (i32, i32) {
    %c0_i32 = arith.constant 0 : i32
    %c0_i32_0 = arith.constant 0 : i32
    %c0_i32_1 = arith.constant 0 : i32
    return %c0_i32, %c0_i32_0 : i32, i32
  }
  func.func @transform_4(%arg0: i32) -> (i32, i32) {
    %c0_i32 = arith.constant 0 : i32
    %c0_i32_0 = arith.constant 0 : i32
    %c0_i32_1 = arith.constant 0 : i32
    return %c0_i32, %c0_i32_0 : i32, i32
  }
  func.func @transform_5(%arg0: i32) -> (i32, i32, i32, i32) {
    %c0_i32 = arith.constant 0 : i32
    %c0_i32_0 = arith.constant 0 : i32
    %c0_i32_1 = arith.constant 0 : i32
    %c0_i32_2 = arith.constant 0 : i32
    return %arg0, %c0_i32, %c0_i32_0, %c0_i32_1 : i32, i32, i32, i32
  }
}

</mosaic_0001>

<llo_original>
// kernel: tpu_custom_call.1
$region0: #{tpu_custom_call.1}
  #allocation0 [shape = 'u32[]', space=smem, size = 0x4, offset = 0x4, fixed_abs, tag = 'smem constant byte address 0x4 - core index']
  #allocation1 [shape = 'u32[144,128]{1,0:T(1,128)}', space=vmem, size = 0x12000, scoped, tag = 'internal scratch']
  %s0 = inlined_call_operand.vmem [shape: f32[3], index: 0, kind: input, shape index: {}]
  %s1 = inlined_call_operand.vmem [shape: f32[3], index: 1, kind: input, shape index: {}]
  %s2 = inlined_call_operand.hbm [shape: u8[2,3,20,24], index: 2, kind: input, shape index: {}]
  %s3 = inlined_call_operand.vmem [shape: bf16[16,20], index: 3, kind: input, shape index: {}]
  %s4 = inlined_call_operand.vmem [shape: bf16[24,16], index: 4, kind: input, shape index: {}]
  %s5 = inlined_call_operand.hbm [shape: f32[2,3,16,16], index: 5, kind: output, shape index: {}]
  %s6 = sld [smem:[#allocation0]]
  $region65: #{tpu_custom_call.1} parent=0
    _
  %s8 = ssub.s32 1, %s6
  %s9 = scalar_select 0, %s8, %s6
  $region1: #{tpu_custom_call.1} parent=0
    #allocation2 [shape = 'u8[512]{0}', space=smem, size = 0x200, scoped, tag = 'input window, operand 0, single buffered']
    #allocation3 [shape = 's32[2]{0}', space=sflag, size = 0x8, scoped, tag = 'scoped memory for tpu_custom_call.1']
    #allocation4 [shape = 's32[2]{0}', space=sflag, size = 0x8, scoped, tag = 'scoped memory for tpu_custom_call.1']
    #allocation5 [shape = 's32[2]{0}', space=sflag, size = 0x8, scoped, tag = 'scoped memory for tpu_custom_call.1']
    #allocation6 [shape = 'u8[512]{0}', space=smem, size = 0x200, scoped, tag = 'input window, operand 1, single buffered']
    #allocation7 [shape = 's32[1]{0}', space=sflag, size = 0x4, scoped, tag = 'scoped memory for tpu_custom_call.1']
    #allocation8 [shape = 'u8[18432]{0}', space=vmem, size = 0x4800, scoped, tag = 'input window, operand 2']
    #allocation9 [shape = 'u8[49152]{0}', space=vmem, size = 0xc000, scoped, tag = 'output window, operand 0']
    %10 = vsyncpa [#allocation5], 0
    %11 = vsyncpa [#allocation7], 0
    %12 = vsyncpa [#allocation3], 0
    %s13 = scalar_lea.sflag [#allocation3], 1
    %14 = vsyncpa %s13, 0
    %15 = vsyncpa [#allocation4], 0
    %s16 = scalar_lea.sflag [#allocation4], 1
    %17 = vsyncpa %s16, 0
    loop: start=0, step=1, limit=4
    $region2: #{tpu_custom_call.1} parent=1 // loop_pre_header
      _
    $region3: #{tpu_custom_call.1} parent=1 // loop_header
      %s19 = sphi 0, %s23
      %p20 = scmp.ge.s32.totalorder %s19, 4
      %s27 = sphi 0, %s27
      %s29 = sphi 0, %s27
      %s30 = sphi 0, %s29
      %s44 = sphi 0, %s30
      %s48 = sphi 0, %s48
      %s50 = sphi 0, %s48
      %s51 = sphi 0, %s50
      %s65 = sphi 0, %s51
      %s71 = sphi 0, %s73
      %s74 = sphi 0, %s71
      %s75 = sphi 0, %s74
      %s91 = sphi 0, %s75
      %s95 = sphi 0, %s95
      %s97 = sphi 0, %s95
      %s98 = sphi 0, %s97
      %s112 = sphi 0, %s98
      %s116 = sphi 0, %s116
      %s118 = sphi 0, %s116
      %s119 = sphi 0, %s118
      %s133 = sphi 0, %s119
      %s139 = sphi 0, %s141
      %s142 = sphi 0, %s139
      %s143 = sphi 0, %s142
      %s159 = sphi 0, %s143
    $region4: #{tpu_custom_call.1} parent=1 // loop_header_branch
      %22 = sbr.rel (%p20) target = $region8
    $region5: #{tpu_custom_call.1} parent=1 // loop_body
      %s24 = ssub.s32 %s19, 1
      %s25 = ssub.s32 %s19, 2
      %s26 = sadd.s32 %s19, 1
      %s28 = sadd.s32 %s27, 1
      %p31 = scmp.eq.s32.totalorder %s19, 1
      %p32 = scmp.ne.s32.totalorder %s27, %s29
      %p33 = scmp.eq.s32.totalorder %s19, 0
      %p34 = por %p32, %p33
      %p35 = scmp.ne.s32.totalorder %s27, %s29
      %p36 = scmp.eq.s32.totalorder %s24, 1
      %p37 = por %p35, %p36
      %p38 = scmp.ne.s32.totalorder %s29, %s30
      %p39 = scmp.eq.s32.totalorder %s24, 0
      %p40 = por %p38, %p39
      %p41 = scmp.ne.s32.totalorder %s29, %s30
      %p42 = scmp.eq.s32.totalorder %s25, 1
      %p43 = por %p41, %p42
      %p45 = scmp.ne.s32.totalorder %s30, %s44
      %p46 = scmp.eq.s32.totalorder %s25, 0
      %p47 = por %p45, %p46
      %s49 = sadd.s32 %s48, 1
      %p52 = scmp.eq.s32.totalorder %s19, 1
      %p53 = scmp.ne.s32.totalorder %s48, %s50
      %p54 = scmp.eq.s32.totalorder %s19, 0
      %p55 = por %p53, %p54
      %p56 = scmp.ne.s32.totalorder %s48, %s50
      %p57 = scmp.eq.s32.totalorder %s24, 1
      %p58 = por %p56, %p57
      %p59 = scmp.ne.s32.totalorder %s50, %s51
      %p60 = scmp.eq.s32.totalorder %s24, 0
      %p61 = por %p59, %p60
      %p62 = scmp.ne.s32.totalorder %s50, %s51
      %p63 = scmp.eq.s32.totalorder %s25, 1
      %p64 = por %p62, %p63
      %p66 = scmp.ne.s32.totalorder %s51, %s65
      %p67 = scmp.eq.s32.totalorder %s25, 0
      %p68 = por %p66, %p67
      %s69 = ssub.s32 %s19, %s26
      %p70 = scmp.eq.s32.totalorder %s69, 0
      %s72 = sadd.s32 %s71, 1
      %s73 = scalar_select %p70, %s71, %s72
      %p76 = pneg %p70
      %p77 = scmp.eq.s32.totalorder %s19, 1
      %p78 = por %p76, %p77
      %p79 = scmp.ne.s32.totalorder %s71, %s74
      %p80 = scmp.eq.s32.totalorder %s19, 0
      %p81 = por %p79, %p80
      %p82 = scmp.ne.s32.totalorder %s71, %s74
      %p83 = scmp.eq.s32.totalorder %s24, 1
      %p84 = por %p82, %p83
      %p85 = scmp.ne.s32.totalorder %s74, %s75
      %p86 = scmp.eq.s32.totalorder %s24, 0
      %p87 = por %p85, %p86
      %p88 = scmp.ne.s32.totalorder %s74, %s75
      %p89 = scmp.eq.s32.totalorder %s25, 1
      %p90 = por %p88, %p89
      %p92 = scmp.ne.s32.totalorder %s75, %s91
      %p93 = scmp.eq.s32.totalorder %s25, 0
      %p94 = por %p92, %p93
      %s96 = sadd.s32 %s95, 1
      %p99 = scmp.eq.s32.totalorder %s19, 1
      %p100 = scmp.ne.s32.totalorder %s95, %s97
      %p101 = scmp.eq.s32.totalorder %s19, 0
      %p102 = por %p100, %p101
      %p103 = scmp.ne.s32.totalorder %s95, %s97
      %p104 = scmp.eq.s32.totalorder %s24, 1
      %p105 = por %p103, %p104
      %p106 = scmp.ne.s32.totalorder %s97, %s98
      %p107 = scmp.eq.s32.totalorder %s24, 0
      %p108 = por %p106, %p107
      %p109 = scmp.ne.s32.totalorder %s97, %s98
      %p110 = scmp.eq.s32.totalorder %s25, 1
      %p111 = por %p109, %p110
      %p113 = scmp.ne.s32.totalorder %s98, %s112
      %p114 = scmp.eq.s32.totalorder %s25, 0
      %p115 = por %p113, %p114
      %s117 = sadd.s32 %s116, 1
      %p120 = scmp.eq.s32.totalorder %s19, 1
      %p121 = scmp.ne.s32.totalorder %s116, %s118
      %p122 = scmp.eq.s32.totalorder %s19, 0
      %p123 = por %p121, %p122
      %p124 = scmp.ne.s32.totalorder %s116, %s118
      %p125 = scmp.eq.s32.totalorder %s24, 1
      %p126 = por %p124, %p125
      %p127 = scmp.ne.s32.totalorder %s118, %s119
      %p128 = scmp.eq.s32.totalorder %s24, 0
      %p129 = por %p127, %p128
      %p130 = scmp.ne.s32.totalorder %s118, %s119
      %p131 = scmp.eq.s32.totalorder %s25, 1
      %p132 = por %p130, %p131
      %p134 = scmp.ne.s32.totalorder %s119, %s133
      %p135 = scmp.eq.s32.totalorder %s25, 0
      %p136 = por %p134, %p135
      %s137 = ssub.s32 %s19, %s26
      %p138 = scmp.eq.s32.totalorder %s137, 0
      %s140 = sadd.s32 %s139, 1
      %s141 = scalar_select %p138, %s139, %s140
      %p144 = pneg %p138
      %p145 = scmp.eq.s32.totalorder %s19, 1
      %p146 = por %p144, %p145
      %p147 = scmp.ne.s32.totalorder %s139, %s142
      %p148 = scmp.eq.s32.totalorder %s19, 0
      %p149 = por %p147, %p148
      %p150 = scmp.ne.s32.totalorder %s139, %s142
      %p151 = scmp.eq.s32.totalorder %s24, 1
      %p152 = por %p150, %p151
      %p153 = scmp.ne.s32.totalorder %s142, %s143
      %p154 = scmp.eq.s32.totalorder %s24, 0
      %p155 = por %p153, %p154
      %p156 = scmp.ne.s32.totalorder %s142, %s143
      %p157 = scmp.eq.s32.totalorder %s25, 1
      %p158 = por %p156, %p157
      %p160 = scmp.ne.s32.totalorder %s143, %s159
      %p161 = scmp.eq.s32.totalorder %s25, 0
      %p162 = por %p160, %p161
      %p163 = scmp.le.s32.totalorder 1, %s19
      %p164 = scmp.lt.s32.totalorder %s19, 3
      %p165 = pnand %p163, %p164
      %p166 = pneg %p165
      // Predicated region
      $region9: #{tpu_custom_call.1} parent=5 // pred_check
        _
      $region10: #{tpu_custom_call.1} parent=5 // pred_check_branch
        %168 = sbr.rel (%p165) target = $region12
      $region11: #{tpu_custom_call.1} parent=5 // pred_region
        %s169 = ssub.s32 %s19, 1
        // Predicated region
        $region13: #{tpu_custom_call.1} parent=11 // pred_check
          %p170 = pneg %p40
        $region14: #{tpu_custom_call.1} parent=11 // pred_check_branch
          %172 = sbr.rel (%p170) target = $region16
        $region15: #{tpu_custom_call.1} parent=11 // pred_region
          %s174 = ssub.s32 16, 16
          %175 = vsyncadd [#allocation5], %s174
          %s177 = sshll.u32 %s0, 4
          %s178 = int_to_ptr.vmem [resolvable:$true] %s177
          %180 = dma.vmem_to_smem %s178, 16, [#allocation2], [#allocation5]
        $region16: #{tpu_custom_call.1} parent=11 // pred_fallthru
          _
        // Predicated region
        $region17: #{tpu_custom_call.1} parent=11 // pred_check
          %p181 = pneg %p61
        $region18: #{tpu_custom_call.1} parent=11 // pred_check_branch
          %183 = sbr.rel (%p181) target = $region20
        $region19: #{tpu_custom_call.1} parent=11 // pred_region
          %s185 = ssub.s32 16, 16
          %186 = vsyncadd [#allocation7], %s185
          %s188 = sshll.u32 %s1, 4
          %s189 = int_to_ptr.vmem [resolvable:$true] %s188
          %191 = dma.vmem_to_smem %s189, 16, [#allocation6], [#allocation7]
        $region20: #{tpu_custom_call.1} parent=11 // pred_fallthru
          _
        // Predicated region
        $region21: #{tpu_custom_call.1} parent=11 // pred_check
          %p192 = pneg %p108
        $region22: #{tpu_custom_call.1} parent=11 // pred_check_branch
          %194 = sbr.rel (%p192) target = $region24
        $region23: #{tpu_custom_call.1} parent=11 // pred_region
          _
        $region24: #{tpu_custom_call.1} parent=11 // pred_fallthru
          _
        // Predicated region
        $region25: #{tpu_custom_call.1} parent=11 // pred_check
          %p195 = pneg %p129
        $region26: #{tpu_custom_call.1} parent=11 // pred_check_branch
          %197 = sbr.rel (%p195) target = $region28
        $region27: #{tpu_custom_call.1} parent=11 // pred_region
          _
        $region28: #{tpu_custom_call.1} parent=11 // pred_fallthru
          _
      $region12: #{tpu_custom_call.1} parent=5 // pred_fallthru
        _
      %p198 = scmp.lt.s32.totalorder %s19, 2
      // Predicated region
      $region29: #{tpu_custom_call.1} parent=5 // pred_check
        %p199 = pneg %p198
      $region30: #{tpu_custom_call.1} parent=5 // pred_check_branch
        %201 = sbr.rel (%p199) target = $region32
      $region31: #{tpu_custom_call.1} parent=5 // pred_region
        // Predicated region
        $region33: #{tpu_custom_call.1} parent=31 // pred_check
          %p202 = pneg %p81
        $region34: #{tpu_custom_call.1} parent=31 // pred_check_branch
          %204 = sbr.rel (%p202) target = $region36
        $region35: #{tpu_custom_call.1} parent=31 // pred_region
          %s205 = sand.u32 %s71, 1
          %s206 = scalar_lea.sflag [#allocation3], %s205
          %s207 = sand.u32 %s71, 1
          %s208 = smul.addr %s207, 18
          %s209 = scalar_lea.vmem [#allocation8], %s208
          %s211 = ssub.s32 288, 288
          %212 = vsyncadd %s206, %s211
          %s213 = smul.addr %s19, 9
          %s214 = smul.addr %s213, 32
          %s215 = scalar_lea.hbm %s2, %s214
          %s216 = sshll.u32 %s209, 4
          %s217 = int_to_ptr.vmem [resolvable:$true] %s216
          %222 = dma.hbm_to_vmem [thread:$0]  %s215, 288, %s217, %s206, 32, 32, 2
        $region36: #{tpu_custom_call.1} parent=31 // pred_fallthru
          _
      $region32: #{tpu_custom_call.1} parent=5 // pred_fallthru
        _
      %p223 = scmp.le.s32.totalorder 1, %s19
      %p224 = scmp.lt.s32.totalorder %s19, 3
      %p225 = pnand %p223, %p224
      %p226 = pneg %p225
      // Predicated region
      $region37: #{tpu_custom_call.1} parent=5 // pred_check
        _
      $region38: #{tpu_custom_call.1} parent=5 // pred_check_branch
        %228 = sbr.rel (%p225) target = $region40
      $region39: #{tpu_custom_call.1} parent=5 // pred_region
        %s229 = ssub.s32 %s19, 1
        // Predicated region
        $region41: #{tpu_custom_call.1} parent=39 // pred_check
          %p230 = pneg %p40
        $region42: #{tpu_custom_call.1} parent=39 // pred_check_branch
          %232 = sbr.rel (%p230) target = $region44
        $region43: #{tpu_custom_call.1} parent=39 // pred_region
          %233 = dma.done [#allocation5], 16
        $region44: #{tpu_custom_call.1} parent=39 // pred_fallthru
          _
        // Predicated region
        $region45: #{tpu_custom_call.1} parent=39 // pred_check
          %p234 = pneg %p61
        $region46: #{tpu_custom_call.1} parent=39 // pred_check_branch
          %236 = sbr.rel (%p234) target = $region48
        $region47: #{tpu_custom_call.1} parent=39 // pred_region
          %237 = dma.done [#allocation7], 16
        $region48: #{tpu_custom_call.1} parent=39 // pred_fallthru
          _
        %s238 = sand.u32 %s74, 1
        %s239 = scalar_lea.sflag [#allocation3], %s238
        %s240 = sand.u32 %s74, 1
        %s241 = smul.addr %s240, 18
        %s242 = scalar_lea.vmem [#allocation8], %s241
        // Predicated region
        $region49: #{tpu_custom_call.1} parent=39 // pred_check
          %p243 = pneg %p87
        $region50: #{tpu_custom_call.1} parent=39 // pred_check_branch
          %245 = sbr.rel (%p243) target = $region52
        $region51: #{tpu_custom_call.1} parent=39 // pred_region
          %246 = dma.done %s239, 288
        $region52: #{tpu_custom_call.1} parent=39 // pred_fallthru
          _
        %247 = sfence
        %p248 = pneg %p40
        %p249 = pneg %p37
        %p250 = pneg %p61
        %p251 = pneg %p58
        %s252 = sand.u32 %s74, 1
        %s253 = scalar_lea.sflag [#allocation3], %s252
        %s254 = sand.u32 %s74, 1
        %s255 = smul.addr %s254, 18
        %s256 = scalar_lea.vmem [#allocation8], %s255
        %p257 = pneg %p87
        %p258 = pneg %p84
        %p259 = pneg %p108
        %p260 = pneg %p105
        %p261 = pneg %p129
        %p262 = pneg %p126
        %p263 = pneg %p155
        %p264 = pneg %p152
        %s265 = sand.u32 %s142, 1
        %s266 = scalar_lea.sflag [#allocation4], %s265
        %s267 = sand.u32 %s142, 1
        %s268 = smul.addr %s267, 48
        %s269 = scalar_lea.vmem [#allocation9], %s268
        %v271 = vld [vmem:[%s3] sm:$0xf]
        %v272 = vld [vmem:[%s3 + $0x4] sm:$0xf]
        %v273 = vld [vmem:[%s4] sm:$0xf]
        %v274 = vld [vmem:[%s4 + $0x4] sm:$0xf]
        %v275 = vld [vmem:[%s4 + $0x8] sm:$0xf]
        %v276 = vld [vmem:[%s242] sm:$0x3]
        %v277 = vld [vmem:[%s242 + $0x2] sm:$0x3]
        %v278 = vld [vmem:[%s242 + $0x4] sm:$0x1]
        %v279 = vunpack.c.l.u8.bf16 %v276
        %v280 = vunpack.c.l.u8.bf16 %v277
        %v281 = vunpack.c.l.u8.bf16 %v278
        %v285 = vunpack.c.l.b16 %v279
        %v286 = vunpack.c.l.b16 %v280
        %v287 = vunpack.c.l.b16 %v281
        %v288 = vpack.c.b16 %v286, %v285
        %v289 = vpack.c.b16 %v287, %v287
        %v293 = vunpack.c.l.b16 %v273
        %v294 = vunpack.c.l.b16 %v274
        %v295 = vunpack.c.l.b16 %v275
        %v296 = vpack.c.b16 %v294, %v293
        %v297 = vpack.c.b16 %v295, %v295
        %vm299 = vcmask 195584
        %v301 = vsel %vm299, %v288, 0
        %v304 = vsel %vm299, %v289, 0
        %vm306 = vcmask 1043456
        %v308 = vsel %vm306, %v297, 0
        %310 = vmatprep.subr.bf16.mxu0 0
        %311 = vmatpush1.bf16.msra.mxu0 %v296
        %312 = vmatprep.subr.bf16.mxu0 0
        %313 = vmatpush1.bf16.msra.mxu0 %v308
        %314 = vmatprep.subr.bf16.mxu0 0
        %315 = vmatpush1.bf16.msra.mxu0 0
        %316 = vmatprep.subr.bf16.mxu0 0
        %317 = vmatpush1.bf16.msra.mxu0 0
        %318 = vmatprep.subr.bf16.mxu0 0
        %319 = vmatpush1.bf16.msra.mxu0 0
        %320 = vmatprep.subr.bf16.mxu0 0
        %321 = vmatpush1.bf16.msra.mxu0 0
        %322 = vmatprep.subr.bf16.mxu0 0
        %323 = vmatpush1.bf16.msra.mxu0 0
        %324 = vmatprep.subr.bf16.mxu0 0
        %325 = vmatpush1.bf16.msra.mxu0 0
        %326 = vmatprep.subr.bf16.mxu0 0
        %327 = vmatpush1.bf16.msra.mxu0 0
        %328 = vmatprep.subr.bf16.mxu0 0
        %329 = vmatpush1.bf16.msra.mxu0 0
        %330 = vmatprep.subr.bf16.mxu0 0
        %331 = vmatpush1.bf16.msra.mxu0 0
        %332 = vmatprep.subr.bf16.mxu0 0
        %333 = vmatpush1.bf16.msra.mxu0 0
        %334 = vmatprep.subr.bf16.mxu0 0
        %335 = vmatpush1.bf16.msra.mxu0 0
        %336 = vmatprep.subr.bf16.mxu0 0
        %337 = vmatpush1.bf16.msra.mxu0 0
        %338 = vmatprep.subr.bf16.mxu0 0
        %339 = vmatpush1.bf16.msra.mxu0 0
        %340 = vmatprep.subr.bf16.mxu0 0
        %341 = vmatpush1.bf16.msra.mxu0 0
        %342 = vmatprep.mubr.bf16.mxu0 0
        %343 = vmatmul.mubr.bf16.gmra.mrb[0].mxu0 %v301
        %v344 = vpop.f32.mrb[0].mxu0
        %v345 = vadd.f32 0.0, %v344
        %v346 = vpop.f32.mrb[0].mxu0
        %v347 = vpop.f32.mrb[0].mxu0
        %v348 = vadd.f32 0.0, %v347
        %v349 = vpop.f32.mrb[0].mxu0
        %350 = vmatprep.mubr.bf16.mxu0 0
        %351 = vmatmul.mubr.bf16.gmra.mrb[0].mxu0 %v304
        %v352 = vpop.f32.mrb[0].mxu0
        %v353 = vadd.f32 0.0, %v352
        %v354 = vpop.f32.mrb[0].mxu0
        %v355 = vpop.f32.mrb[0].mxu0
        %v356 = vpop.f32.mrb[0].mxu0
        %357 = vdwg.mxu0
        %v358 = vpack.c.bf16 %v348, %v345
        %v359 = vpack.c.bf16 %v353, %v353
        %v362 = vunpack.c.l.b16 %v271
        %v363 = vunpack.c.l.b16 %v272
        %v364 = vpack.c.b16 %v363, %v362
        %vm365 = vcmask 162816
        %v367 = vsel %vm365, %v364, 0
        %vm369 = vcmask 1041408
        %v371 = vsel %vm369, %v359, 0
        %373 = vmatprep.subr.bf16.mxu0 0
        %374 = vmatpush1.bf16.msra.mxu0 %v358
        %375 = vmatprep.subr.bf16.mxu0 0
        %376 = vmatpush1.bf16.msra.mxu0 %v371
        %377 = vmatprep.subr.bf16.mxu0 0
        %378 = vmatpush1.bf16.msra.mxu0 0
        %379 = vmatprep.subr.bf16.mxu0 0
        %380 = vmatpush1.bf16.msra.mxu0 0
        %381 = vmatprep.subr.bf16.mxu0 0
        %382 = vmatpush1.bf16.msra.mxu0 0
        %383 = vmatprep.subr.bf16.mxu0 0
        %384 = vmatpush1.bf16.msra.mxu0 0
        %385 = vmatprep.subr.bf16.mxu0 0
        %386 = vmatpush1.bf16.msra.mxu0 0
        %387 = vmatprep.subr.bf16.mxu0 0
        %388 = vmatpush1.bf16.msra.mxu0 0
        %389 = vmatprep.subr.bf16.mxu0 0
        %390 = vmatpush1.bf16.msra.mxu0 0
        %391 = vmatprep.subr.bf16.mxu0 0
        %392 = vmatpush1.bf16.msra.mxu0 0
        %393 = vmatprep.subr.bf16.mxu0 0
        %394 = vmatpush1.bf16.msra.mxu0 0
        %395 = vmatprep.subr.bf16.mxu0 0
        %396 = vmatpush1.bf16.msra.mxu0 0
        %397 = vmatprep.subr.bf16.mxu0 0
        %398 = vmatpush1.bf16.msra.mxu0 0
        %399 = vmatprep.subr.bf16.mxu0 0
        %400 = vmatpush1.bf16.msra.mxu0 0
        %401 = vmatprep.subr.bf16.mxu0 0
        %402 = vmatpush1.bf16.msra.mxu0 0
        %403 = vmatprep.subr.bf16.mxu0 0
        %404 = vmatpush1.bf16.msra.mxu0 0
        %405 = vmatprep.mubr.bf16.mxu0 0
        %406 = vmatmul.mubr.bf16.gmra.mrb[0].mxu0 %v367
        %v407 = vpop.f32.mrb[0].mxu0
        %v408 = vadd.f32 0.0, %v407
        %v409 = vpop.f32.mrb[0].mxu0
        %v410 = vpop.f32.mrb[0].mxu0
        %v411 = vadd.f32 0.0, %v410
        %v412 = vpop.f32.mrb[0].mxu0
        %413 = vdwg.mxu0
        %s414 = sld [smem:[#allocation2]]
        %v415 = vstv %s414
        %v416 = vmul.f32 %v408, %v415
        %v417 = vmul.f32 %v411, %v415
        %s418 = sld [smem:[#allocation6]]
        %v419 = vstv %s418
        %v420 = vadd.f32 %v416, %v419
        %v421 = vadd.f32 %v417, %v419
        %vm422 = vcmask 130048
        %423 = vst.msk [vmem:[%s269] sm:$0xff] %vm422, %v420
        %424 = vst.msk [vmem:[%s269 + $0x8] sm:$0xff] %vm422, %v421
        %s425 = scalar_lea.vmem %s242, 6 [#allocation8]
        %v426 = vld [vmem:[%s425] sm:$0x3]
        %v427 = vld [vmem:[%s425 + $0x2] sm:$0x3]
        %v428 = vld [vmem:[%s425 + $0x4] sm:$0x1]
        %v429 = vunpack.c.l.u8.bf16 %v426
        %v430 = vunpack.c.l.u8.bf16 %v427
        %v431 = vunpack.c.l.u8.bf16 %v428
        %v435 = vunpack.c.l.b16 %v429
        %v436 = vunpack.c.l.b16 %v430
        %v437 = vunpack.c.l.b16 %v431
        %v438 = vpack.c.b16 %v436, %v435
        %v439 = vpack.c.b16 %v437, %v437
        %v441 = vsel %vm299, %v438, 0
        %v444 = vsel %vm299, %v439, 0
        %446 = vmatprep.subr.bf16.mxu0 0
        %447 = vmatpush1.bf16.msra.mxu0 %v296
        %448 = vmatprep.subr.bf16.mxu0 0
        %449 = vmatpush1.bf16.msra.mxu0 %v308
        %450 = vmatprep.subr.bf16.mxu0 0
        %451 = vmatpush1.bf16.msra.mxu0 0
        %452 = vmatprep.subr.bf16.mxu0 0
        %453 = vmatpush1.bf16.msra.mxu0 0
        %454 = vmatprep.subr.bf16.mxu0 0
        %455 = vmatpush1.bf16.msra.mxu0 0
        %456 = vmatprep.subr.bf16.mxu0 0
        %457 = vmatpush1.bf16.msra.mxu0 0
        %458 = vmatprep.subr.bf16.mxu0 0
        %459 = vmatpush1.bf16.msra.mxu0 0
        %460 = vmatprep.subr.bf16.mxu0 0
        %461 = vmatpush1.bf16.msra.mxu0 0
        %462 = vmatprep.subr.bf16.mxu0 0
        %463 = vmatpush1.bf16.msra.mxu0 0
        %464 = vmatprep.subr.bf16.mxu0 0
        %465 = vmatpush1.bf16.msra.mxu0 0
        %466 = vmatprep.subr.bf16.mxu0 0
        %467 = vmatpush1.bf16.msra.mxu0 0
        %468 = vmatprep.subr.bf16.mxu0 0
        %469 = vmatpush1.bf16.msra.mxu0 0
        %470 = vmatprep.subr.bf16.mxu0 0
        %471 = vmatpush1.bf16.msra.mxu0 0
        %472 = vmatprep.subr.bf16.mxu0 0
        %473 = vmatpush1.bf16.msra.mxu0 0
        %474 = vmatprep.subr.bf16.mxu0 0
        %475 = vmatpush1.bf16.msra.mxu0 0
        %476 = vmatprep.subr.bf16.mxu0 0
        %477 = vmatpush1.bf16.msra.mxu0 0
        %478 = vmatprep.mubr.bf16.mxu0 0
        %479 = vmatmul.mubr.bf16.gmra.mrb[0].mxu0 %v441
        %v480 = vpop.f32.mrb[0].mxu0
        %v481 = vadd.f32 0.0, %v480
        %v482 = vpop.f32.mrb[0].mxu0
        %v483 = vpop.f32.mrb[0].mxu0
        %v484 = vadd.f32 0.0, %v483
        %v485 = vpop.f32.mrb[0].mxu0
        %486 = vmatprep.mubr.bf16.mxu0 0
        %487 = vmatmul.mubr.bf16.gmra.mrb[0].mxu0 %v444
        %v488 = vpop.f32.mrb[0].mxu0
        %v489 = vadd.f32 0.0, %v488
        %v490 = vpop.f32.mrb[0].mxu0
        %v491 = vpop.f32.mrb[0].mxu0
        %v492 = vpop.f32.mrb[0].mxu0
        %493 = vdwg.mxu0
        %v494 = vpack.c.bf16 %v484, %v481
        %v495 = vpack.c.bf16 %v489, %v489
        %v497 = vsel %vm369, %v495, 0
        %499 = vmatprep.subr.bf16.mxu0 0
        %500 = vmatpush1.bf16.msra.mxu0 %v494
        %501 = vmatprep.subr.bf16.mxu0 0
        %502 = vmatpush1.bf16.msra.mxu0 %v497
        %503 = vmatprep.subr.bf16.mxu0 0
        %504 = vmatpush1.bf16.msra.mxu0 0
        %505 = vmatprep.subr.bf16.mxu0 0
        %506 = vmatpush1.bf16.msra.mxu0 0
        %507 = vmatprep.subr.bf16.mxu0 0
        %508 = vmatpush1.bf16.msra.mxu0 0
        %509 = vmatprep.subr.bf16.mxu0 0
        %510 = vmatpush1.bf16.msra.mxu0 0
        %511 = vmatprep.subr.bf16.mxu0 0
        %512 = vmatpush1.bf16.msra.mxu0 0
        %513 = vmatprep.subr.bf16.mxu0 0
        %514 = vmatpush1.bf16.msra.mxu0 0
        %515 = vmatprep.subr.bf16.mxu0 0
        %516 = vmatpush1.bf16.msra.mxu0 0
        %517 = vmatprep.subr.bf16.mxu0 0
        %518 = vmatpush1.bf16.msra.mxu0 0
        %519 = vmatprep.subr.bf16.mxu0 0
        %520 = vmatpush1.bf16.msra.mxu0 0
        %521 = vmatprep.subr.bf16.mxu0 0
        %522 = vmatpush1.bf16.msra.mxu0 0
        %523 = vmatprep.subr.bf16.mxu0 0
        %524 = vmatpush1.bf16.msra.mxu0 0
        %525 = vmatprep.subr.bf16.mxu0 0
        %526 = vmatpush1.bf16.msra.mxu0 0
        %527 = vmatprep.subr.bf16.mxu0 0
        %528 = vmatpush1.bf16.msra.mxu0 0
        %529 = vmatprep.subr.bf16.mxu0 0
        %530 = vmatpush1.bf16.msra.mxu0 0
        %531 = vmatprep.mubr.bf16.mxu0 0
        %532 = vmatmul.mubr.bf16.gmra.mrb[0].mxu0 %v367
        %v533 = vpop.f32.mrb[0].mxu0
        %v534 = vadd.f32 0.0, %v533
        %v535 = vpop.f32.mrb[0].mxu0
        %v536 = vpop.f32.mrb[0].mxu0
        %v537 = vadd.f32 0.0, %v536
        %v538 = vpop.f32.mrb[0].mxu0
        %539 = vdwg.mxu0
        %s540 = sld [smem:[#allocation2 + $0x1]]
        %v541 = vstv %s540
        %v542 = vmul.f32 %v534, %v541
        %v543 = vmul.f32 %v537, %v541
        %s544 = sld [smem:[#allocation6 + $0x1]]
        %v545 = vstv %s544
        %v546 = vadd.f32 %v542, %v545
        %v547 = vadd.f32 %v543, %v545
        %s548 = scalar_lea.vmem %s269, 16 [#allocation9]
        %549 = vst.msk [vmem:[%s548] sm:$0xff] %vm422, %v546
        %550 = vst.msk [vmem:[%s548 + $0x8] sm:$0xff] %vm422, %v547
        %s551 = scalar_lea.vmem %s242, 12 [#allocation8]
        %v552 = vld [vmem:[%s551] sm:$0x3]
        %v553 = vld [vmem:[%s551 + $0x2] sm:$0x3]
        %v554 = vld [vmem:[%s551 + $0x4] sm:$0x1]
        %v555 = vunpack.c.l.u8.bf16 %v552
        %v556 = vunpack.c.l.u8.bf16 %v553
        %v557 = vunpack.c.l.u8.bf16 %v554
        %v561 = vunpack.c.l.b16 %v555
        %v562 = vunpack.c.l.b16 %v556
        %v563 = vunpack.c.l.b16 %v557
        %v564 = vpack.c.b16 %v562, %v561
        %v565 = vpack.c.b16 %v563, %v563
        %v567 = vsel %vm299, %v564, 0
        %v570 = vsel %vm299, %v565, 0
        %572 = vmatprep.subr.bf16.mxu0 0
        %573 = vmatpush1.bf16.msra.mxu0 %v296
        %574 = vmatprep.subr.bf16.mxu0 0
        %575 = vmatpush1.bf16.msra.mxu0 %v308
        %576 = vmatprep.subr.bf16.mxu0 0
        %577 = vmatpush1.bf16.msra.mxu0 0
        %578 = vmatprep.subr.bf16.mxu0 0
        %579 = vmatpush1.bf16.msra.mxu0 0
        %580 = vmatprep.subr.bf16.mxu0 0
        %581 = vmatpush1.bf16.msra.mxu0 0
        %582 = vmatprep.subr.bf16.mxu0 0
        %583 = vmatpush1.bf16.msra.mxu0 0
        %584 = vmatprep.subr.bf16.mxu0 0
        %585 = vmatpush1.bf16.msra.mxu0 0
        %586 = vmatprep.subr.bf16.mxu0 0
        %587 = vmatpush1.bf16.msra.mxu0 0
        %588 = vmatprep.subr.bf16.mxu0 0
        %589 = vmatpush1.bf16.msra.mxu0 0
        %590 = vmatprep.subr.bf16.mxu0 0
        %591 = vmatpush1.bf16.msra.mxu0 0
        %592 = vmatprep.subr.bf16.mxu0 0
        %593 = vmatpush1.bf16.msra.mxu0 0
        %594 = vmatprep.subr.bf16.mxu0 0
        %595 = vmatpush1.bf16.msra.mxu0 0
        %596 = vmatprep.subr.bf16.mxu0 0
        %597 = vmatpush1.bf16.msra.mxu0 0
        %598 = vmatprep.subr.bf16.mxu0 0
        %599 = vmatpush1.bf16.msra.mxu0 0
        %600 = vmatprep.subr.bf16.mxu0 0
        %601 = vmatpush1.bf16.msra.mxu0 0
        %602 = vmatprep.subr.bf16.mxu0 0
        %603 = vmatpush1.bf16.msra.mxu0 0
        %604 = vmatprep.mubr.bf16.mxu0 0
        %605 = vmatmul.mubr.bf16.gmra.mrb[0].mxu0 %v567
        %v606 = vpop.f32.mrb[0].mxu0
        %v607 = vadd.f32 0.0, %v606
        %v608 = vpop.f32.mrb[0].mxu0
        %v609 = vpop.f32.mrb[0].mxu0
        %v610 = vadd.f32 0.0, %v609
        %v611 = vpop.f32.mrb[0].mxu0
        %612 = vmatprep.mubr.bf16.mxu0 0
        %613 = vmatmul.mubr.bf16.gmra.mrb[0].mxu0 %v570
        %v614 = vpop.f32.mrb[0].mxu0
        %v615 = vadd.f32 0.0, %v614
        %v616 = vpop.f32.mrb[0].mxu0
        %v617 = vpop.f32.mrb[0].mxu0
        %v618 = vpop.f32.mrb[0].mxu0
        %619 = vdwg.mxu0
        %v620 = vpack.c.bf16 %v610, %v607
        %v621 = vpack.c.bf16 %v615, %v615
        %v623 = vsel %vm369, %v621, 0
        %625 = vmatprep.subr.bf16.mxu0 0
        %626 = vmatpush1.bf16.msra.mxu0 %v620
        %627 = vmatprep.subr.bf16.mxu0 0
        %628 = vmatpush1.bf16.msra.mxu0 %v623
        %629 = vmatprep.subr.bf16.mxu0 0
        %630 = vmatpush1.bf16.msra.mxu0 0
        %631 = vmatprep.subr.bf16.mxu0 0
        %632 = vmatpush1.bf16.msra.mxu0 0
        %633 = vmatprep.subr.bf16.mxu0 0
        %634 = vmatpush1.bf16.msra.mxu0 0
        %635 = vmatprep.subr.bf16.mxu0 0
        %636 = vmatpush1.bf16.msra.mxu0 0
        %637 = vmatprep.subr.bf16.mxu0 0
        %638 = vmatpush1.bf16.msra.mxu0 0
        %639 = vmatprep.subr.bf16.mxu0 0
        %640 = vmatpush1.bf16.msra.mxu0 0
        %641 = vmatprep.subr.bf16.mxu0 0
        %642 = vmatpush1.bf16.msra.mxu0 0
        %643 = vmatprep.subr.bf16.mxu0 0
        %644 = vmatpush1.bf16.msra.mxu0 0
        %645 = vmatprep.subr.bf16.mxu0 0
        %646 = vmatpush1.bf16.msra.mxu0 0
        %647 = vmatprep.subr.bf16.mxu0 0
        %648 = vmatpush1.bf16.msra.mxu0 0
        %649 = vmatprep.subr.bf16.mxu0 0
        %650 = vmatpush1.bf16.msra.mxu0 0
        %651 = vmatprep.subr.bf16.mxu0 0
        %652 = vmatpush1.bf16.msra.mxu0 0
        %653 = vmatprep.subr.bf16.mxu0 0
        %654 = vmatpush1.bf16.msra.mxu0 0
        %655 = vmatprep.subr.bf16.mxu0 0
        %656 = vmatpush1.bf16.msra.mxu0 0
        %657 = vmatprep.mubr.bf16.mxu0 0
        %658 = vmatmul.mubr.bf16.gmra.mrb[0].mxu0 %v367
        %v659 = vpop.f32.mrb[0].mxu0
        %v660 = vadd.f32 0.0, %v659
        %v661 = vpop.f32.mrb[0].mxu0
        %v662 = vpop.f32.mrb[0].mxu0
        %v663 = vadd.f32 0.0, %v662
        %v664 = vpop.f32.mrb[0].mxu0
        %665 = vdwg.mxu0
        %s666 = sld [smem:[#allocation2 + $0x2]]
        %v667 = vstv %s666
        %v668 = vmul.f32 %v660, %v667
        %v669 = vmul.f32 %v663, %v667
        %s670 = sld [smem:[#allocation6 + $0x2]]
        %v671 = vstv %s670
        %v672 = vadd.f32 %v668, %v671
        %v673 = vadd.f32 %v669, %v671
        %s674 = scalar_lea.vmem %s269, 32 [#allocation9]
        %675 = vst.msk [vmem:[%s674] sm:$0xff] %vm422, %v672
        %676 = vst.msk [vmem:[%s674 + $0x8] sm:$0xff] %vm422, %v673
        %s677 = sand.u32 %s142, 1
        %s678 = scalar_lea.sflag [#allocation4], %s677
        %s679 = sand.u32 %s142, 1
        %s680 = smul.addr %s679, 48
        %s681 = scalar_lea.vmem [#allocation9], %s680
        // Predicated region
        $region53: #{tpu_custom_call.1} parent=39 // pred_check
          %p682 = pneg %p152
        $region54: #{tpu_custom_call.1} parent=39 // pred_check_branch
          %684 = sbr.rel (%p682) target = $region56
        $region55: #{tpu_custom_call.1} parent=39 // pred_region
          %s686 = ssub.s32 768, 768
          %687 = vsyncadd %s678, %s686
          %s688 = smul.addr %s24, 6
          %s689 = smul.addr %s688, 128
          %s690 = scalar_lea.hbm %s5, %s689
          %s691 = sshll.u32 %s681, 4
          %s692 = int_to_ptr.vmem [resolvable:$true] %s691
          %697 = dma.vmem_to_hbm [thread:$0]  %s692, 768, %s690, %s678, 128, 128, 8
        $region56: #{tpu_custom_call.1} parent=39 // pred_fallthru
          _
      $region40: #{tpu_custom_call.1} parent=5 // pred_fallthru
        _
      %p698 = scmp.le.s32.totalorder 2, %s19
      // Predicated region
      $region57: #{tpu_custom_call.1} parent=5 // pred_check
        %p699 = pneg %p698
      $region58: #{tpu_custom_call.1} parent=5 // pred_check_branch
        %701 = sbr.rel (%p699) target = $region60
      $region59: #{tpu_custom_call.1} parent=5 // pred_region
        %s702 = ssub.s32 %s19, 2
        // Predicated region
        $region61: #{tpu_custom_call.1} parent=59 // pred_check
          %p703 = pneg %p158
        $region62: #{tpu_custom_call.1} parent=59 // pred_check_branch
          %705 = sbr.rel (%p703) target = $region64
        $region63: #{tpu_custom_call.1} parent=59 // pred_region
          %s706 = sand.u32 %s143, 1
          %s707 = scalar_lea.sflag [#allocation4], %s706
          %s708 = sand.u32 %s143, 1
          %s709 = smul.addr %s708, 48
          %s710 = scalar_lea.vmem [#allocation9], %s709
          %711 = dma.done %s707, 768
        $region64: #{tpu_custom_call.1} parent=59 // pred_fallthru
          _
      $region60: #{tpu_custom_call.1} parent=5 // pred_fallthru
        _
    $region6: #{tpu_custom_call.1} parent=1 // loop_footer
      %s23 = sadd.s32 1, %s19
    $region7: #{tpu_custom_call.1} parent=1 // loop_footer_branch
      %18 = sbr.rel target = $region3
    $region8: #{tpu_custom_call.1} parent=1 // loop_exit
      _
    %712 = vsyncpa [#allocation3], 1
    %s713 = scalar_lea.sflag [#allocation3], 1
    %714 = vsyncpa %s713, 1
    %715 = vsyncpa [#allocation4], 1
    %s716 = scalar_lea.sflag [#allocation4], 1
    %717 = vsyncpa %s716, 1
    %718 = vsyncpa [#allocation5], 1
    %s719 = scalar_lea.sflag [#allocation5], 1
    %720 = vsyncpa %s719, 1
    %721 = vsyncpa [#allocation7], 1

</llo_original>
